<compile_context>
chip_gen: v6e
topology: v6e:2x2x1
jax: 0.10.0
libtpu: 0.0.40
codegen_flags: <defaults>
</compile_context>

<pallas_src>
import math

import jax
import jax.numpy as jnp
from jax.experimental import pallas as pl
from jax.experimental.pallas import tpu as pltpu


def _round_up(a, b):
    return (a + b - 1) // b * b


def _plan_k(K, tk_max):
    """Pick (K_padded, tk) such that tk divides K_padded and tk is either a
    multiple of 128 or the full (legal full-dim) K.  Padding is only needed in
    the rare case K % 128 != 0 and K > tk_max."""
    if K % 128 == 0:
        q = K // 128
        d = max(1, min(tk_max // 128, q))
        while q % d:
            d -= 1
        return K, 128 * d
    if K <= tk_max:
        return K, K                      # single full-width K block (legal)
    Kp = _round_up(K, 128)
    q = Kp // 128
    d = max(1, min(tk_max // 128, q))
    while q % d:
        d -= 1
    return Kp, 128 * d


def _pick_tm(B, tm_max):
    """Batch tile: multiple of 16; >=2 tiles when B >= 32 (v7x megacore);
    small B uses one full-dim block (no padding, always a legal block)."""
    if B < 32:
        return B
    n_tiles = max(2, -(-B // tm_max))
    tm = _round_up(-(-B // n_tiles), 16)
    return min(tm, tm_max)


def prepare_hash_params(weight, bias, scale, *, tk_max=8192):
    """One-time hash-layer parameter prep, hoisted out of the per-call path.

    weight: (hash_bit, in_features) -- PyTorch nn.Linear layout.
    bias:   (hash_bit,)
    scale:  python float (self.scale); folded into W and bias here, so this
            must be re-run whenever scale changes (it changes with iter_num
            during training -- trivial, it's just this function).
    Returns (w_t_bf16 of shape (K_padded, hash_bit), bias_row f32 (1, hash_bit)).
    """
    N, K = weight.shape
    Kp, _ = _plan_k(K, tk_max)
    w_t = jnp.transpose(weight).astype(jnp.float32) * jnp.float32(scale)  # (K, N)
    if Kp > K:
        w_t = jnp.pad(w_t, ((0, Kp - K), (0, 0)))
    w_t_bf16 = w_t.astype(jnp.bfloat16)
    b_row = (bias.astype(jnp.float32) * jnp.float32(scale)).reshape(1, N)
    return w_t_bf16, b_row


def hash_head_kernel(x_ref, w_ref, b_ref, o_ref):
    # x_ref: (tm, tk)  f32 (or bf16) flattened-feature tile; cast to bf16 here
    # w_ref: (tk, N)   bf16 scale-folded W^T tile
    # b_ref: (1, N)    f32 scale-folded bias
    # o_ref: (tm, N)   f32 output tile, resident across K -> the accumulator
    k = pl.program_id(1)

    @pl.when(k == 0)
    def _():
        o_ref[...] = jnp.zeros_like(o_ref)

    # bf16 operands, f32 accumulation on the MXU.
    o_ref[...] += jnp.dot(x_ref[...].astype(jnp.bfloat16), w_ref[...],
                          preferred_element_type=jnp.float32)

    @pl.when(k == pl.num_programs(1) - 1)
    def _():
        o_ref[...] = jnp.tanh(o_ref[...] + b_ref[...])


def incresv2_hash_head(feat_nchw, w_t_bf16, b_row, *, tm_max=256, tk_max=8192):
    """feat_nchw: (B, C, H, W) feature map (output of the conv backbone),
    f32 or bf16.  w_t_bf16 / b_row: outputs of prepare_hash_params.
    Returns (B, hash_bit) float32 = tanh(scale * (flatten(feat) @ W^T + b)).
    """
    B = feat_nchw.shape[0]
    x = feat_nchw.reshape(B, -1)       # free view; matches torch x.view(B, -1)
    K = x.shape[1]
    Kp, N = w_t_bf16.shape
    Kp_expected, tk = _plan_k(K, tk_max)
    assert Kp == Kp_expected, "weights prepared with different K / tk_max"
    assert b_row.shape == (1, N)

    if Kp > K:                          # rare: K % 128 != 0 and K > tk_max
        x = jnp.pad(x, ((0, 0), (0, Kp - K)))

    tm = _pick_tm(B, tm_max)
    grid = (pl.cdiv(B, tm), Kp // tk)   # batch "parallel", K "arbitrary" (last)
    n_b_tiles = grid[0]

    x_bytes = int(jnp.dtype(x.dtype).itemsize)
    # Double-buffered streaming tiles + resident output tile + bias.
    vmem_bytes = 2 * (tm * tk * x_bytes + tk * N * 2) + tm * N * 4 + N * 4
    # Explicit limit: raises v5e's 16 MiB default scope, stays well under
    # v7x's 64 MiB physical VMEM; v6e/v5e have 128 MiB physical.
    vmem_limit = int(min(48 << 20, max(32 << 20, vmem_bytes + (8 << 20))))

    cost = pl.CostEstimate(
        flops=2 * B * Kp * N,
        transcendentals=B * N,
        bytes_accessed=(B * Kp * x_bytes            # x streamed once
                        + n_b_tiles * Kp * N * 2    # W re-streamed per batch tile
                        + N * 4                     # bias
                        + B * N * 4),               # output write
    )

    out = pl.pallas_call(
        hash_head_kernel,
        out_shape=jax.ShapeDtypeStruct((B, N), jnp.float32),
        grid=grid,
        in_specs=[
            # x tile: new block per (i, k)
            pl.BlockSpec((tm, tk), lambda i, k: (i, k)),
            # W tile: keyed on k; re-streamed once per batch tile (W is small
            # now that it is not N-padded, so this traffic is negligible).
            pl.BlockSpec((tk, N), lambda i, k: (k, 0)),
            # bias: tiny constant block
            pl.BlockSpec((1, N), lambda i, k: (0, 0)),
        ],
        # Same output block across k -> resident f32 accumulator target.
        out_specs=pl.BlockSpec((tm, N), lambda i, k: (i, 0)),
        compiler_params=pltpu.CompilerParams(
            dimension_semantics=("parallel", "arbitrary"),
            vmem_limit_bytes=vmem_limit),
        cost_estimate=cost,
    )(x, w_t_bf16, b_row)

    return out


if __name__ == "__main__":
    # Small synthetic shapes consistent with the forward:
    # feature map (B, C, H, W) -> flatten -> Linear(in_features, hash_bit)
    B, C, H, W = 2, 4, 8, 8
    hash_bit = 32
    in_features = C * H * W

    key = jax.random.PRNGKey(0)
    k_feat, k_w = jax.random.split(key)

    # TODO(synk): pretrained InceptionV4 backbone (feature_layers) not
    # reproducible in-script; a synthetic feature map stands in for its output.
    feat = jax.random.normal(k_feat, (B, C, H, W), dtype=jnp.float32)

    # Deterministic parameter init matching the module's __init__:
    #   self.hash_layer.weight.data.normal_(0, 0.01); bias.fill_(0.0)
    weight = 0.01 * jax.random.normal(k_w, (hash_bit, in_features),
                                      dtype=jnp.float32)
    bias = jnp.zeros((hash_bit,), dtype=jnp.float32)

    # Scale schedule from the module (eval path: iter_num stays 0 ->
    # scale = init_scale * (1 + gamma*0)**power = 1.0).
    iter_num = 0
    init_scale, gamma, power = 1.0, 0.005, 0.5
    scale = init_scale * math.pow(1.0 + gamma * iter_num, power)

    # One-time parameter prep (transpose + scale fold + bf16 cast).
    w_t_bf16, b_row = prepare_hash_params(weight, bias, scale)

    out = incresv2_hash_head(feat, w_t_bf16, b_row)
    out = jax.block_until_ready(out)
    assert out.shape == (B, hash_bit)

    # Tight reference: same math with bf16-rounded operands (scale folded into
    # W before rounding, exactly as the kernel sees it), f32 accumulation.
    x_f = feat.reshape(B, -1)
    x_bfr = x_f.astype(jnp.bfloat16).astype(jnp.float32)
    w_bfr = (weight.astype(jnp.float32) * scale).astype(jnp.bfloat16).astype(jnp.float32)
    ref_bf16 = jnp.tanh(x_bfr @ w_bfr.T + scale * bias)
    assert jnp.allclose(out, ref_bf16, atol=1e-3, rtol=1e-3)

    # Loose check against the pure f32 PyTorch-semantics reference.
    ref_f32 = jnp.tanh(scale * (x_f @ weight.T + bias))
    assert jnp.allclose(out, ref_f32, atol=3e-2, rtol=3e-2)

    print("KERNEL_OK")
</pallas_src>

<mosaic_0001>
module attributes {stable_mosaic.version = 11 : i64} {
  func.func @hash_head_kernel(%arg0: i32, %arg1: i32, %arg2: memref<2x256xf32, #tpu.memory_space<vmem>>, %arg3: memref<256x32xbf16, #tpu.memory_space<vmem>>, %arg4: memref<1x32xf32, #tpu.memory_space<vmem>>, %arg5: memref<2x32xf32, #tpu.memory_space<vmem>>) attributes {dimension_semantics = [#tpu.dimension_semantics<parallel>, #tpu.dimension_semantics<arbitrary>], iteration_bounds = array<i64: 1, 1>, scalar_prefetch = 0 : i64, scratch_operands = 0 : i64, tpu.core_type = #tpu.core_type<tc>, window_params = [{transform_indices = @transform_0, window_bounds = array<i64: 2, 256>}, {transform_indices = @transform_1, window_bounds = array<i64: 256, 32>}, {pipeline_mode = #tpu.pipeline_mode<synchronous>, transform_indices = @transform_2, window_bounds = array<i64: 1, 32>}, {transform_indices = @transform_3, window_bounds = array<i64: 2, 32>}]} {
    %c0_i32 = arith.constant 0 : i32
    %0 = arith.cmpi eq, %arg1, %c0_i32 : i32
    %1 = arith.extui %0 : i1 to i32
    %c0_i32_0 = arith.constant 0 : i32
    %2 = arith.cmpi ne, %1, %c0_i32_0 : i32
    scf.if %2 {
      %cst_10 = arith.constant 0.000000e+00 : f32
      %13 = vector.broadcast %cst_10 : f32 to vector<2x32xf32>
      %c0_11 = arith.constant 0 : index
      %c0_12 = arith.constant 0 : index
      %14 = vector.load %arg5[%c0_11, %c0_12] : memref<2x32xf32, #tpu.memory_space<vmem>>, vector<2x32xf32>
      tpu.vector_store %arg5[%c0_11, %c0_12], %13 {strides = array<i32>} : memref<2x32xf32, #tpu.memory_space<vmem>>, vector<2x32xf32>,
    } else {
    }
    %c0 = arith.constant 0 : index
    %c0_1 = arith.constant 0 : index
    %3 = vector.load %arg5[%c0, %c0_1] : memref<2x32xf32, #tpu.memory_space<vmem>>, vector<2x32xf32>
    %c0_2 = arith.constant 0 : index
    %c0_3 = arith.constant 0 : index
    %4 = vector.load %arg2[%c0_2, %c0_3] : memref<2x256xf32, #tpu.memory_space<vmem>>, vector<2x256xf32>
    %5 = arith.truncf %4 : vector<2x256xf32> to vector<2x256xbf16>
    %c0_4 = arith.constant 0 : index
    %c0_5 = arith.constant 0 : index
    %6 = vector.load %arg3[%c0_4, %c0_5] : memref<256x32xbf16, #tpu.memory_space<vmem>>, vector<256x32xbf16>
    %cst = arith.constant dense<0.000000e+00> : vector<2x32xf32>
    %7 = tpu.matmul %5, %6, %cst {dimension_numbers = #tpu.dot_dimension_numbers<[1], [0], [0], [1], [0, 0, 1, 1], [], []>} : vector<2x256xbf16>, vector<256x32xbf16>, vector<2x32xf32> -> vector<2x32xf32>
    %8 = arith.addf %3, %7 : vector<2x32xf32>
    %c0_6 = arith.constant 0 : index
    %c0_7 = arith.constant 0 : index
    %9 = vector.load %arg5[%c0_6, %c0_7] : memref<2x32xf32, #tpu.memory_space<vmem>>, vector<2x32xf32>
    tpu.vector_store %arg5[%c0_6, %c0_7], %8 {strides = array<i32>} : memref<2x32xf32, #tpu.memory_space<vmem>>, vector<2x32xf32>,
    %c0_i32_8 = arith.constant 0 : i32
    %10 = arith.cmpi eq, %arg1, %c0_i32_8 : i32
    %11 = arith.extui %10 : i1 to i32
    %c0_i32_9 = arith.constant 0 : i32
    %12 = arith.cmpi ne, %11, %c0_i32_9 : i32
    scf.if %12 {
      %c0_10 = arith.constant 0 : index
      %c0_11 = arith.constant 0 : index
      %13 = vector.load %arg5[%c0_10, %c0_11] : memref<2x32xf32, #tpu.memory_space<vmem>>, vector<2x32xf32>
      %c0_12 = arith.constant 0 : index
      %c0_13 = arith.constant 0 : index
      %14 = vector.load %arg4[%c0_12, %c0_13] : memref<1x32xf32, #tpu.memory_space<vmem>>, vector<1x32xf32>
      %15 = vector.broadcast %14 : vector<1x32xf32> to vector<2x32xf32>
      %16 = arith.addf %13, %15 : vector<2x32xf32>
      %17 = math.tanh %16 : vector<2x32xf32>
      %c0_14 = arith.constant 0 : index
      %c0_15 = arith.constant 0 : index
      %18 = vector.load %arg5[%c0_14, %c0_15] : memref<2x32xf32, #tpu.memory_space<vmem>>, vector<2x32xf32>
      tpu.vector_store %arg5[%c0_14, %c0_15], %17 {strides = array<i32>} : memref<2x32xf32, #tpu.memory_space<vmem>>, vector<2x32xf32>,
    } else {
    }
    return
  }
  func.func @transform_0(%arg0: i32, %arg1: i32) -> (i32, i32) {
    %c0_i32 = arith.constant 0 : i32
    return %arg0, %arg1 : i32, i32
  }
  func.func @transform_1(%arg0: i32, %arg1: i32) -> (i32, i32) {
    %c0_i32 = arith.constant 0 : i32
    %c0_i32_0 = arith.constant 0 : i32
    return %arg1, %c0_i32 : i32, i32
  }
  func.func @transform_2(%arg0: i32, %arg1: i32) -> (i32, i32) {
    %c0_i32 = arith.constant 0 : i32
    %c0_i32_0 = arith.constant 0 : i32
    %c0_i32_1 = arith.constant 0 : i32
    return %c0_i32, %c0_i32_0 : i32, i32
  }
  func.func @transform_3(%arg0: i32, %arg1: i32) -> (i32, i32) {
    %c0_i32 = arith.constant 0 : i32
    %c0_i32_0 = arith.constant 0 : i32
    return %arg0, %c0_i32 : i32, i32
  }
}

</mosaic_0001>

<llo_original>
// kernel: tpu_custom_call.1
$region0: #{tpu_custom_call.1}
  #allocation0 [shape = 'u32[]', space=smem, size = 0x4, offset = 0x4, fixed_abs, tag = 'smem constant byte address 0x4 - core index']
  #allocation1 [shape = 'u32[144,128]{1,0:T(1,128)}', space=vmem, size = 0x12000, scoped, tag = 'internal scratch']
  %s0 = inlined_call_operand.vmem [shape: f32[2,256], index: 0, kind: input, shape index: {}]
  %s1 = inlined_call_operand.vmem [shape: bf16[256,32], index: 1, kind: input, shape index: {}]
  %s2 = inlined_call_operand.vmem [shape: f32[1,32], index: 2, kind: input, shape index: {}]
  %s3 = inlined_call_operand.hbm [shape: f32[2,32], index: 3, kind: output, shape index: {}]
  %s4 = sld [smem:[#allocation0]]
  $region30: #{tpu_custom_call.1} parent=0
    _
  %s6 = ssub.s32 1, %s4
  %s7 = scalar_select 0, %s6, %s4
  $region1: #{tpu_custom_call.1} parent=0
    #allocation2 [shape = 'u8[1024]{0}', space=vmem, size = 0x400, scoped, tag = 'output window, operand 0, single buffered']
    #allocation3 [shape = 's32[1]{0}', space=sflag, size = 0x4, scoped, tag = 'scoped memory for tpu_custom_call.1']
    %8 = vsyncpa [#allocation3], 0
    // Predicated region
    $region2: #{tpu_custom_call.1} parent=1 // pred_check
      _
    $region3: #{tpu_custom_call.1} parent=1 // pred_check_branch
      %10 = sbr.rel (0) target = $region5
    $region4: #{tpu_custom_call.1} parent=1 // pred_region
      _
    $region5: #{tpu_custom_call.1} parent=1 // pred_fallthru
      _
    // Predicated region
    $region6: #{tpu_custom_call.1} parent=1 // pred_check
      _
    $region7: #{tpu_custom_call.1} parent=1 // pred_check_branch
      %12 = sbr.rel (0) target = $region9
    $region8: #{tpu_custom_call.1} parent=1 // pred_region
      _
    $region9: #{tpu_custom_call.1} parent=1 // pred_fallthru
      _
    // Predicated region
    $region10: #{tpu_custom_call.1} parent=1 // pred_check
      _
    $region11: #{tpu_custom_call.1} parent=1 // pred_check_branch
      %14 = sbr.rel (0) target = $region13
    $region12: #{tpu_custom_call.1} parent=1 // pred_region
      _
    $region13: #{tpu_custom_call.1} parent=1 // pred_fallthru
      _
    %p16 = scmp.eq.s32.totalorder 0, 0
    // Predicated region
    $region14: #{tpu_custom_call.1} parent=1 // pred_check
      %p17 = pneg %p16
    $region15: #{tpu_custom_call.1} parent=1 // pred_check_branch
      %19 = sbr.rel (%p17) target = $region17
    $region16: #{tpu_custom_call.1} parent=1 // pred_region
      %vm20 = vcmask 254976
      %21 = vst.msk [vmem:[#allocation2] sm:$0x3] %vm20, 0.0
    $region17: #{tpu_custom_call.1} parent=1 // pred_fallthru
      _
    %v22 = vld [vmem:[#allocation2] sm:$0x3]
    %v23 = vld [vmem:[%s0] sm:$0xf]
    %v26 = vunpack.c.l.s4 1983009808
    %v27 = vunpack.c.0.s8 %v26
    %v28 = vlaneseq
    %v29 = vshrl.u32 %v28, 7
    %v30 = vsub.s32 %v27, %v29
    %v31 = vrot.slane %v23, %v30
    %v32 = vcombine.high %v31, %v31
    %v35 = vpack.c.bf16 %v31, %v31
    %v36 = vpack.c.bf16 %v32, %v32
    %v37 = vld [vmem:[%s1] sm:$0xf]
    %v38 = vld [vmem:[%s1 + $0x4] sm:$0xf]
    %v39 = vld [vmem:[%s1 + $0x8] sm:$0xf]
    %v40 = vld [vmem:[%s1 + $0xc] sm:$0xf]
    %v41 = vld [vmem:[%s1 + $0x10] sm:$0xf]
    %v42 = vld [vmem:[%s1 + $0x14] sm:$0xf]
    %v43 = vld [vmem:[%s1 + $0x18] sm:$0xf]
    %v44 = vld [vmem:[%s1 + $0x1c] sm:$0xf]
    %v45 = vld [vmem:[%s1 + $0x20] sm:$0xf]
    %v46 = vld [vmem:[%s1 + $0x24] sm:$0xf]
    %v47 = vld [vmem:[%s1 + $0x28] sm:$0xf]
    %v48 = vld [vmem:[%s1 + $0x2c] sm:$0xf]
    %v49 = vld [vmem:[%s1 + $0x30] sm:$0xf]
    %v50 = vld [vmem:[%s1 + $0x34] sm:$0xf]
    %v51 = vld [vmem:[%s1 + $0x38] sm:$0xf]
    %v52 = vld [vmem:[%s1 + $0x3c] sm:$0xf]
    %v53 = vld [vmem:[%s1 + $0x40] sm:$0xf]
    %v54 = vld [vmem:[%s1 + $0x44] sm:$0xf]
    %v55 = vld [vmem:[%s1 + $0x48] sm:$0xf]
    %v56 = vld [vmem:[%s1 + $0x4c] sm:$0xf]
    %v57 = vld [vmem:[%s1 + $0x50] sm:$0xf]
    %v58 = vld [vmem:[%s1 + $0x54] sm:$0xf]
    %v59 = vld [vmem:[%s1 + $0x58] sm:$0xf]
    %v60 = vld [vmem:[%s1 + $0x5c] sm:$0xf]
    %v61 = vld [vmem:[%s1 + $0x60] sm:$0xf]
    %v62 = vld [vmem:[%s1 + $0x64] sm:$0xf]
    %v63 = vld [vmem:[%s1 + $0x68] sm:$0xf]
    %v64 = vld [vmem:[%s1 + $0x6c] sm:$0xf]
    %v65 = vld [vmem:[%s1 + $0x70] sm:$0xf]
    %v66 = vld [vmem:[%s1 + $0x74] sm:$0xf]
    %v67 = vld [vmem:[%s1 + $0x78] sm:$0xf]
    %v68 = vld [vmem:[%s1 + $0x7c] sm:$0xf]
    %v101 = vunpack.c.l.b16 %v37
    %v102 = vunpack.c.l.b16 %v38
    %v103 = vunpack.c.l.b16 %v39
    %v104 = vunpack.c.l.b16 %v40
    %v105 = vunpack.c.l.b16 %v41
    %v106 = vunpack.c.l.b16 %v42
    %v107 = vunpack.c.l.b16 %v43
    %v108 = vunpack.c.l.b16 %v44
    %v109 = vunpack.c.l.b16 %v45
    %v110 = vunpack.c.l.b16 %v46
    %v111 = vunpack.c.l.b16 %v47
    %v112 = vunpack.c.l.b16 %v48
    %v113 = vunpack.c.l.b16 %v49
    %v114 = vunpack.c.l.b16 %v50
    %v115 = vunpack.c.l.b16 %v51
    %v116 = vunpack.c.l.b16 %v52
    %v117 = vunpack.c.l.b16 %v53
    %v118 = vunpack.c.l.b16 %v54
    %v119 = vunpack.c.l.b16 %v55
    %v120 = vunpack.c.l.b16 %v56
    %v121 = vunpack.c.l.b16 %v57
    %v122 = vunpack.c.l.b16 %v58
    %v123 = vunpack.c.l.b16 %v59
    %v124 = vunpack.c.l.b16 %v60
    %v125 = vunpack.c.l.b16 %v61
    %v126 = vunpack.c.l.b16 %v62
    %v127 = vunpack.c.l.b16 %v63
    %v128 = vunpack.c.l.b16 %v64
    %v129 = vunpack.c.l.b16 %v65
    %v130 = vunpack.c.l.b16 %v66
    %v131 = vunpack.c.l.b16 %v67
    %v132 = vunpack.c.l.b16 %v68
    %v133 = vpack.c.b16 %v102, %v101
    %v134 = vpack.c.b16 %v104, %v103
    %v135 = vpack.c.b16 %v106, %v105
    %v136 = vpack.c.b16 %v108, %v107
    %v137 = vpack.c.b16 %v110, %v109
    %v138 = vpack.c.b16 %v112, %v111
    %v139 = vpack.c.b16 %v114, %v113
    %v140 = vpack.c.b16 %v116, %v115
    %v141 = vpack.c.b16 %v118, %v117
    %v142 = vpack.c.b16 %v120, %v119
    %v143 = vpack.c.b16 %v122, %v121
    %v144 = vpack.c.b16 %v124, %v123
    %v145 = vpack.c.b16 %v126, %v125
    %v146 = vpack.c.b16 %v128, %v127
    %v147 = vpack.c.b16 %v130, %v129
    %v148 = vpack.c.b16 %v132, %v131
    %165 = vmatprep.subr.bf16.mxu0 0
    %166 = vmatpush1.bf16.msra.mxu0 %v140
    %167 = vmatprep.subr.bf16.mxu0 0
    %168 = vmatpush1.bf16.msra.mxu0 %v139
    %169 = vmatprep.subr.bf16.mxu0 0
    %170 = vmatpush1.bf16.msra.mxu0 %v138
    %171 = vmatprep.subr.bf16.mxu0 0
    %172 = vmatpush1.bf16.msra.mxu0 %v137
    %173 = vmatprep.subr.bf16.mxu0 0
    %174 = vmatpush1.bf16.msra.mxu0 %v136
    %175 = vmatprep.subr.bf16.mxu0 0
    %176 = vmatpush1.bf16.msra.mxu0 %v135
    %177 = vmatprep.subr.bf16.mxu0 0
    %178 = vmatpush1.bf16.msra.mxu0 %v134
    %179 = vmatprep.subr.bf16.mxu0 0
    %180 = vmatpush1.bf16.msra.mxu0 %v133
    %181 = vmatprep.subr.bf16.mxu0 0
    %182 = vmatpush2.bf16.msra.mxu0 %v148
    %183 = vmatprep.subr.bf16.mxu0 0
    %184 = vmatpush2.bf16.msra.mxu0 %v147
    %185 = vmatprep.subr.bf16.mxu0 0
    %186 = vmatpush2.bf16.msra.mxu0 %v146
    %187 = vmatprep.subr.bf16.mxu0 0
    %188 = vmatpush2.bf16.msra.mxu0 %v145
    %189 = vmatprep.subr.bf16.mxu0 0
    %190 = vmatpush2.bf16.msra.mxu0 %v144
    %191 = vmatprep.subr.bf16.mxu0 0
    %192 = vmatpush2.bf16.msra.mxu0 %v143
    %193 = vmatprep.subr.bf16.mxu0 0
    %194 = vmatpush2.bf16.msra.mxu0 %v142
    %195 = vmatprep.subr.bf16.mxu0 0
    %196 = vmatpush2.bf16.msra.mxu0 %v141
    %197 = vmatprep.mubr.bf16.mxu0 %v36
    %198 = vmatmul.mubr.bf16.gmra.mxu0 %v35
    %v199 = vpop.f32.mrf.mxu0
    %v200 = vadd.f32 0.0, %v199
    %v201 = vpop.f32.mrf.mxu0
    %v202 = vpop.f32.mrf.mxu0
    %v203 = vpop.f32.mrf.mxu0
    %204 = vdwg.mxu0
    %v205 = vadd.f32 %v22, %v200
    %vm206 = vcmask 254976
    %207 = vst.msk [vmem:[#allocation2] sm:$0x3] %vm206, %v205
    // Predicated region
    $region18: #{tpu_custom_call.1} parent=1 // pred_check
      %p208 = pneg %p16
    $region19: #{tpu_custom_call.1} parent=1 // pred_check_branch
      %210 = sbr.rel (%p208) target = $region21
    $region20: #{tpu_custom_call.1} parent=1 // pred_region
      %v211 = vld [vmem:[#allocation2] sm:$0x3]
      %v212 = vld [vmem:[%s2] sm:$0x1]
      %v214 = vlaneseq
      %v215 = vshrl.u32 %v214, 7
      %v216 = vsub.s32 0, %v215
      %v217 = vrot.slane %v212, %v216
      %v219 = vadd.f32 %v211, %v217
      %v220 = vtanh.pop %v219
      %221 = vst.msk [vmem:[#allocation2] sm:$0x3] %vm206, %v220
    $region21: #{tpu_custom_call.1} parent=1 // pred_fallthru
      _
    // Predicated region
    $region22: #{tpu_custom_call.1} parent=1 // pred_check
      _
    $region23: #{tpu_custom_call.1} parent=1 // pred_check_branch
      %223 = sbr.rel (0) target = $region25
    $region24: #{tpu_custom_call.1} parent=1 // pred_region
      %s225 = ssub.s32 32, 32
      %226 = vsyncadd [#allocation3], %s225
      %s228 = sshll.u32 [#allocation2], 4
      %s229 = int_to_ptr.vmem [resolvable:$true] %s228
      %231 = dma.vmem_to_hbm [thread:$0]  %s229, 32, %s3, [#allocation3]
    $region25: #{tpu_custom_call.1} parent=1 // pred_fallthru
      _
    // Predicated region
    $region26: #{tpu_custom_call.1} parent=1 // pred_check
      _
    $region27: #{tpu_custom_call.1} parent=1 // pred_check_branch
      %233 = sbr.rel (0) target = $region29
    $region28: #{tpu_custom_call.1} parent=1 // pred_region
      %234 = dma.done [#allocation3], 32
    $region29: #{tpu_custom_call.1} parent=1 // pred_fallthru
      _
    %235 = vsyncpa [#allocation3], 1

</llo_original>
